<compile_context>
chip_gen: v7x
topology: tpu7x:2x2x1
jax: 0.10.0
libtpu: 0.0.40
codegen_flags: <defaults>
</compile_context>

<pallas_src>
from functools import partial

import jax
import jax.numpy as jnp
from jax.experimental import pallas as pl
from jax.experimental.pallas import tpu as pltpu

_LANE = 128      # vreg lane width
_SUBLANE = 8     # f32 sublane height
_NEG_BIG = -1e30  # padded-logit bias: exp(_NEG_BIG - m) == 0 in f32, no inf/nan


def _round_up(n, m):
    return ((n + m - 1) // m) * m


def policy_kernel(x_ref, w1_ref, b1_ref, w2_ref, b2_ref, out_ref):
    # fc1: (TB, S) @ (S, 128) on the MXU, accumulate in f32.
    h = jnp.dot(x_ref[...], w1_ref[...], preferred_element_type=jnp.float32)
    # bias + (eval-mode dropout == identity) + relu, all in f32 on the VPU.
    h = jnp.maximum(h + b1_ref[...], 0.0)
    # fc2: (TB, 128) @ (128, A_pad) — lane-dense padded logits.
    s = jnp.dot(h.astype(w2_ref.dtype), w2_ref[...],
                preferred_element_type=jnp.float32)
    s = s + b2_ref[...]                      # padded columns get -1e30 -> exp == 0
    # Numerically-safe softmax over the full 128-lane tile (f32 throughout).
    m = jnp.max(s, axis=-1, keepdims=True)
    e = jnp.exp(s - m)
    denom = jnp.sum(e, axis=-1, keepdims=True)
    inv = pl.reciprocal(denom, approx=True)  # EUP slot, off the VALU critical path
    inv = inv * (2.0 - denom * inv)          # one Newton step -> ~f32 accuracy
    out_ref[...] = (e * inv).astype(out_ref.dtype)


def prepare_policy_params(w1, b1, w2, b2, compute_dtype=jnp.bfloat16):
    """One-time layout plumbing: transpose to (in, out), pad fc2 to 128 lanes.

    w1: (hidden, state_dim)  b1: (hidden,)  w2: (action_dim, hidden)  b2: (action_dim,)
    """
    hidden = w1.shape[0]
    action_dim = w2.shape[0]
    a_pad = _round_up(action_dim, _LANE)

    w1_t = jnp.transpose(w1).astype(compute_dtype)                 # (S, hidden)
    b1_2d = b1.reshape(1, hidden).astype(jnp.float32)              # (1, hidden)
    w2_t = jnp.zeros((hidden, a_pad), compute_dtype)
    w2_t = w2_t.at[:, :action_dim].set(jnp.transpose(w2).astype(compute_dtype))
    # Padded logits get a huge negative bias so they contribute 0 to the softmax sum.
    b2_2d = jnp.full((1, a_pad), _NEG_BIG, jnp.float32)
    b2_2d = b2_2d.at[0, :action_dim].set(b2.astype(jnp.float32))
    return (w1_t, b1_2d, w2_t, b2_2d)


@partial(jax.jit, static_argnames=("action_dim", "block_batch"))
def policy_forward(x, params, *, action_dim, block_batch=256):
    """x: (B, state_dim) float32; params from prepare_policy_params()."""
    w1_t, b1_2d, w2_t, b2_2d = params
    B, S = x.shape
    hidden = w1_t.shape[1]
    a_pad = w2_t.shape[1]
    compute_dtype = w1_t.dtype

    # Batch tile: multiple of 8 sublanes, capped at block_batch; pad B to a whole
    # number of tiles so every block (and store) is full-size / unmasked.
    tb = min(block_batch, _round_up(B, _SUBLANE))
    b_pad = _round_up(B, tb)
    if b_pad != B:
        x = jnp.pad(x, ((0, b_pad - B), (0, 0)))
    x = x.astype(compute_dtype)
    n_blocks = b_pad // tb

    itemsize = jnp.dtype(compute_dtype).itemsize
    cost = pl.CostEstimate(
        flops=2 * b_pad * (S * hidden + hidden * a_pad),
        transcendentals=b_pad * (a_pad + 1),
        bytes_accessed=(b_pad * S * itemsize            # x
                        + S * hidden * itemsize         # w1
                        + hidden * 4                    # b1
                        + hidden * a_pad * itemsize     # w2
                        + a_pad * 4                     # b2
                        + b_pad * a_pad * 4),           # out
    )

    out_padded = pl.pallas_call(
        policy_kernel,
        out_shape=jax.ShapeDtypeStruct((b_pad, a_pad), jnp.float32),
        grid_spec=pltpu.PrefetchScalarGridSpec(
            num_scalar_prefetch=0,
            grid=(n_blocks,),
            in_specs=[
                pl.BlockSpec((tb, S), lambda i: (i, 0)),        # x tile streams
                pl.BlockSpec((S, hidden), lambda i: (0, 0)),    # weights stay resident
                pl.BlockSpec((1, hidden), lambda i: (0, 0)),
                pl.BlockSpec((hidden, a_pad), lambda i: (0, 0)),
                pl.BlockSpec((1, a_pad), lambda i: (0, 0)),
            ],
            out_specs=pl.BlockSpec((tb, a_pad), lambda i: (i, 0)),
        ),
        compiler_params=pltpu.CompilerParams(
            dimension_semantics=("parallel",)),
        cost_estimate=cost,
    )(x, w1_t, b1_2d, w2_t, b2_2d)

    return out_padded[:B, :action_dim]


if __name__ == "__main__":
    # Small shapes consistent with the module: batch=4, state_dim=16, action_dim=8, hidden=128.
    batch, state_dim, action_dim, hidden = 4, 16, 8, 128

    key = jax.random.PRNGKey(0)
    kx, k1, k2, k3, k4 = jax.random.split(key, 5)

    x = jax.random.normal(kx, (batch, state_dim), dtype=jnp.float32)
    # Deterministic parameter init (PyTorch Linear-style uniform bounds).
    w1 = jax.random.uniform(k1, (hidden, state_dim), jnp.float32,
                            -1.0 / state_dim ** 0.5, 1.0 / state_dim ** 0.5)
    b1 = jax.random.uniform(k2, (hidden,), jnp.float32,
                            -1.0 / state_dim ** 0.5, 1.0 / state_dim ** 0.5)
    w2 = jax.random.uniform(k3, (action_dim, hidden), jnp.float32,
                            -1.0 / hidden ** 0.5, 1.0 / hidden ** 0.5)
    b2 = jax.random.uniform(k4, (action_dim,), jnp.float32,
                            -1.0 / hidden ** 0.5, 1.0 / hidden ** 0.5)

    # Pure-JAX reference (eval-mode dropout == identity).
    h_ref = jnp.maximum(x @ w1.T + b1, 0.0)
    ref = jax.nn.softmax(h_ref @ w2.T + b2, axis=1)

    # 1) Strict-precision path (f32 compute dtype) — exact-semantics check.
    params_f32 = prepare_policy_params(w1, b1, w2, b2, compute_dtype=jnp.float32)
    out_f32 = jax.block_until_ready(
        policy_forward(x, params_f32, action_dim=action_dim, block_batch=256))
    assert out_f32.shape == (batch, action_dim)
    assert jnp.allclose(out_f32, ref, atol=1e-5, rtol=1e-5)
    assert jnp.allclose(jnp.sum(out_f32, axis=1), 1.0, atol=1e-5)

    # 2) Performance path (bf16 weights/activations on the MXU, f32 epilogue).
    params_bf16 = prepare_policy_params(w1, b1, w2, b2, compute_dtype=jnp.bfloat16)
    out_bf16 = jax.block_until_ready(
        policy_forward(x, params_bf16, action_dim=action_dim, block_batch=256))
    assert out_bf16.shape == (batch, action_dim)
    assert jnp.allclose(out_bf16, ref, atol=2e-2, rtol=2e-2)
    assert jnp.allclose(jnp.sum(out_bf16, axis=1), 1.0, atol=1e-5)

    print("KERNEL_OK")
</pallas_src>

<mosaic_0001>
module attributes {stable_mosaic.version = 11 : i64} {
  func.func @policy_kernel(%arg0: i32, %arg1: memref<8x16xf32, #tpu.memory_space<vmem>>, %arg2: memref<16x128xf32, #tpu.memory_space<vmem>>, %arg3: memref<1x128xf32, #tpu.memory_space<vmem>>, %arg4: memref<128x128xf32, #tpu.memory_space<vmem>>, %arg5: memref<1x128xf32, #tpu.memory_space<vmem>>, %arg6: memref<8x128xf32, #tpu.memory_space<vmem>>) attributes {dimension_semantics = [#tpu.dimension_semantics<parallel>], iteration_bounds = array<i64: 1>, scalar_prefetch = 0 : i64, scratch_operands = 0 : i64, tpu.core_type = #tpu.core_type<tc>, window_params = [{transform_indices = @transform_0, window_bounds = array<i64: 8, 16>}, {pipeline_mode = #tpu.pipeline_mode<synchronous>, transform_indices = @transform_1, window_bounds = array<i64: 16, 128>}, {pipeline_mode = #tpu.pipeline_mode<synchronous>, transform_indices = @transform_2, window_bounds = array<i64: 1, 128>}, {pipeline_mode = #tpu.pipeline_mode<synchronous>, transform_indices = @transform_3, window_bounds = array<i64: 128, 128>}, {pipeline_mode = #tpu.pipeline_mode<synchronous>, transform_indices = @transform_4, window_bounds = array<i64: 1, 128>}, {transform_indices = @transform_5, window_bounds = array<i64: 8, 128>}]} {
    %c0 = arith.constant 0 : index
    %c0_0 = arith.constant 0 : index
    %0 = vector.load %arg1[%c0, %c0_0] : memref<8x16xf32, #tpu.memory_space<vmem>>, vector<8x16xf32>
    %c0_1 = arith.constant 0 : index
    %c0_2 = arith.constant 0 : index
    %1 = vector.load %arg2[%c0_1, %c0_2] : memref<16x128xf32, #tpu.memory_space<vmem>>, vector<16x128xf32>
    %cst = arith.constant dense<0.000000e+00> : vector<8x128xf32>
    %2 = tpu.matmul %0, %1, %cst {dimension_numbers = #tpu.dot_dimension_numbers<[1], [0], [0], [1], [0, 0, 1, 1], [], []>} : vector<8x16xf32>, vector<16x128xf32>, vector<8x128xf32> -> vector<8x128xf32>
    %c0_3 = arith.constant 0 : index
    %c0_4 = arith.constant 0 : index
    %3 = vector.load %arg3[%c0_3, %c0_4] : memref<1x128xf32, #tpu.memory_space<vmem>>, vector<1x128xf32>
    %4 = vector.broadcast %3 : vector<1x128xf32> to vector<8x128xf32>
    %5 = arith.addf %2, %4 : vector<8x128xf32>
    %cst_5 = arith.constant 0.000000e+00 : f32
    %6 = vector.broadcast %cst_5 : f32 to vector<8x128xf32>
    %7 = arith.maximumf %5, %6 : vector<8x128xf32>
    %c0_6 = arith.constant 0 : index
    %c0_7 = arith.constant 0 : index
    %8 = vector.load %arg4[%c0_6, %c0_7] : memref<128x128xf32, #tpu.memory_space<vmem>>, vector<128x128xf32>
    %cst_8 = arith.constant dense<0.000000e+00> : vector<8x128xf32>
    %9 = tpu.matmul %7, %8, %cst_8 {dimension_numbers = #tpu.dot_dimension_numbers<[1], [0], [0], [1], [0, 0, 1, 1], [], []>} : vector<8x128xf32>, vector<128x128xf32>, vector<8x128xf32> -> vector<8x128xf32>
    %c0_9 = arith.constant 0 : index
    %c0_10 = arith.constant 0 : index
    %10 = vector.load %arg5[%c0_9, %c0_10] : memref<1x128xf32, #tpu.memory_space<vmem>>, vector<1x128xf32>
    %11 = vector.broadcast %10 : vector<1x128xf32> to vector<8x128xf32>
    %12 = arith.addf %9, %11 : vector<8x128xf32>
    %cst_11 = arith.constant dense<0xFF800000> : vector<8xf32>
    %13 = vector.multi_reduction <maximumf>, %12, %cst_11 [1] : vector<8x128xf32> to vector<8xf32>
    %14 = vector.shape_cast %13 : vector<8xf32> to vector<8x1xf32>
    %15 = vector.broadcast %14 : vector<8x1xf32> to vector<8x128xf32>
    %16 = arith.subf %12, %15 : vector<8x128xf32>
    %17 = math.exp %16 : vector<8x128xf32>
    %cst_12 = arith.constant dense<0.000000e+00> : vector<8xf32>
    %18 = vector.multi_reduction <add>, %17, %cst_12 [1] : vector<8x128xf32> to vector<8xf32>
    %19 = vector.shape_cast %18 : vector<8xf32> to vector<8x1xf32>
    %20 = tpu.reciprocal %19 {approx = true} : vector<8x1xf32> -> vector<8x1xf32>
    %21 = arith.mulf %19, %20 : vector<8x1xf32>
    %cst_13 = arith.constant 2.000000e+00 : f32
    %22 = vector.broadcast %cst_13 : f32 to vector<8x1xf32>
    %23 = arith.subf %22, %21 : vector<8x1xf32>
    %24 = arith.mulf %20, %23 : vector<8x1xf32>
    %25 = vector.broadcast %24 : vector<8x1xf32> to vector<8x128xf32>
    %26 = arith.mulf %17, %25 : vector<8x128xf32>
    %c0_14 = arith.constant 0 : index
    %c0_15 = arith.constant 0 : index
    %27 = vector.load %arg6[%c0_14, %c0_15] : memref<8x128xf32, #tpu.memory_space<vmem>>, vector<8x128xf32>
    tpu.vector_store %arg6[%c0_14, %c0_15], %26 {strides = array<i32>} : memref<8x128xf32, #tpu.memory_space<vmem>>, vector<8x128xf32>,
    return
  }
  func.func @transform_0(%arg0: i32) -> (i32, i32) {
    %c0_i32 = arith.constant 0 : i32
    %c0_i32_0 = arith.constant 0 : i32
    return %arg0, %c0_i32 : i32, i32
  }
  func.func @transform_1(%arg0: i32) -> (i32, i32) {
    %c0_i32 = arith.constant 0 : i32
    %c0_i32_0 = arith.constant 0 : i32
    %c0_i32_1 = arith.constant 0 : i32
    return %c0_i32, %c0_i32_0 : i32, i32
  }
  func.func @transform_2(%arg0: i32) -> (i32, i32) {
    %c0_i32 = arith.constant 0 : i32
    %c0_i32_0 = arith.constant 0 : i32
    %c0_i32_1 = arith.constant 0 : i32
    return %c0_i32, %c0_i32_0 : i32, i32
  }
  func.func @transform_3(%arg0: i32) -> (i32, i32) {
    %c0_i32 = arith.constant 0 : i32
    %c0_i32_0 = arith.constant 0 : i32
    %c0_i32_1 = arith.constant 0 : i32
    return %c0_i32, %c0_i32_0 : i32, i32
  }
  func.func @transform_4(%arg0: i32) -> (i32, i32) {
    %c0_i32 = arith.constant 0 : i32
    %c0_i32_0 = arith.constant 0 : i32
    %c0_i32_1 = arith.constant 0 : i32
    return %c0_i32, %c0_i32_0 : i32, i32
  }
  func.func @transform_5(%arg0: i32) -> (i32, i32) {
    %c0_i32 = arith.constant 0 : i32
    %c0_i32_0 = arith.constant 0 : i32
    return %arg0, %c0_i32 : i32, i32
  }
}

</mosaic_0001>

<llo_original>
// kernel: policy_forward.1
$region0: #{policy_forward.1}
  #allocation0 [shape = 'u32[]', space=smem, size = 0x4, offset = 0x4, fixed_abs, tag = 'smem constant byte address 0x4 - core index']
  #allocation1 [shape = 'u32[144,128]{1,0:T(1,128)}', space=vmem, size = 0x12000, scoped, tag = 'internal scratch']
  %s0 = inlined_call_operand.vmem [shape: f32[8,16], index: 0, kind: input, shape index: {}]
  %s1 = inlined_call_operand.vmem [shape: f32[16,128], index: 1, kind: input, shape index: {}]
  %s2 = inlined_call_operand.vmem [shape: f32[1,128], index: 2, kind: input, shape index: {}]
  %s3 = inlined_call_operand.hbm [shape: f32[128,128], index: 3, kind: input, shape index: {}]
  %s4 = inlined_call_operand.vmem [shape: f32[1,128], index: 4, kind: input, shape index: {}]
  %s5 = inlined_call_operand.vmem [shape: f32[8,128], index: 5, kind: output, shape index: {}]
  %s6 = sld [smem:[#allocation0]]
  $region34: #{policy_forward.1} parent=0
    _
  %s8 = ssub.s32 1, %s6
  %s9 = scalar_select 0, %s8, %s6
  $region1: #{policy_forward.1} parent=0
    #allocation2 [shape = 'u8[65536]{0}', space=vmem, size = 0x10000, scoped, tag = 'input window, operand 3, single buffered']
    #allocation3 [shape = 's32[1]{0}', space=sflag, size = 0x4, scoped, tag = 'scoped memory for policy_forward.1']
    %10 = vsyncpa [#allocation3], 0
    // Predicated region
    $region2: #{policy_forward.1} parent=1 // pred_check
      _
    $region3: #{policy_forward.1} parent=1 // pred_check_branch
      %12 = sbr.rel (0) target = $region5
    $region4: #{policy_forward.1} parent=1 // pred_region
      _
    $region5: #{policy_forward.1} parent=1 // pred_fallthru
      _
    // Predicated region
    $region6: #{policy_forward.1} parent=1 // pred_check
      _
    $region7: #{policy_forward.1} parent=1 // pred_check_branch
      %14 = sbr.rel (0) target = $region9
    $region8: #{policy_forward.1} parent=1 // pred_region
      _
    $region9: #{policy_forward.1} parent=1 // pred_fallthru
      _
    // Predicated region
    $region10: #{policy_forward.1} parent=1 // pred_check
      _
    $region11: #{policy_forward.1} parent=1 // pred_check_branch
      %16 = sbr.rel (0) target = $region13
    $region12: #{policy_forward.1} parent=1 // pred_region
      _
    $region13: #{policy_forward.1} parent=1 // pred_fallthru
      _
    // Predicated region
    $region14: #{policy_forward.1} parent=1 // pred_check
      _
    $region15: #{policy_forward.1} parent=1 // pred_check_branch
      %18 = sbr.rel (0) target = $region17
    $region16: #{policy_forward.1} parent=1 // pred_region
      %s20 = ssub.s32 2048, 2048
      %21 = vsyncadd [#allocation3], %s20
      %s22 = sshll.u32 [#allocation2], 4
      %s23 = int_to_ptr.vmem [resolvable:$true] %s22
      %28 = dma.hbm_to_vmem [thread:$0]  %s3, 2048, %s23, [#allocation3], 128, 128, 8
    $region17: #{policy_forward.1} parent=1 // pred_fallthru
      _
    // Predicated region
    $region18: #{policy_forward.1} parent=1 // pred_check
      _
    $region19: #{policy_forward.1} parent=1 // pred_check_branch
      %30 = sbr.rel (0) target = $region21
    $region20: #{policy_forward.1} parent=1 // pred_region
      _
    $region21: #{policy_forward.1} parent=1 // pred_fallthru
      _
    // Predicated region
    $region22: #{policy_forward.1} parent=1 // pred_check
      _
    $region23: #{policy_forward.1} parent=1 // pred_check_branch
      %32 = sbr.rel (0) target = $region25
    $region24: #{policy_forward.1} parent=1 // pred_region
      %33 = dma.done [#allocation3], 2048
    $region25: #{policy_forward.1} parent=1 // pred_fallthru
      _
    %v34 = vld [vmem:[%s0] sm:$0xff]
    %v35 = vld [vmem:[%s1] sm:$0xff]
    %v36 = vld [vmem:[%s1 + $0x8] sm:$0xff]
    %v37 = vld [vmem:[%s2] sm:$0x1]
    %v39 = vlaneseq
    %v40 = vshrl.u32 %v39, 7
    %v41 = vsub.s32 0, %v40
    %v42 = vrot.slane %v37, %v41
    %vm44 = vcmask 130048
    %v46 = vsel %vm44, %v34, 0
    %48 = vmatprep.subr.mxu0 0.0
    %49 = vmatpush1.msra.mxu0 %v35
    %50 = vmatprep.subr.mxu0 0.0
    %51 = vmatpush1.msra.mxu0 %v36
    %52 = vmatprep.subr.mxu0 0.0
    %53 = vmatpush1.msra.mxu0 0.0
    %54 = vmatprep.subr.mxu0 0.0
    %55 = vmatpush1.msra.mxu0 0.0
    %56 = vmatprep.subr.mxu0 0.0
    %57 = vmatpush1.msra.mxu0 0.0
    %58 = vmatprep.subr.mxu0 0.0
    %59 = vmatpush1.msra.mxu0 0.0
    %60 = vmatprep.subr.mxu0 0.0
    %61 = vmatpush1.msra.mxu0 0.0
    %62 = vmatprep.subr.mxu0 0.0
    %63 = vmatpush1.msra.mxu0 0.0
    %64 = vmatprep.subr.mxu0 0.0
    %65 = vmatpush1.msra.mxu0 0.0
    %66 = vmatprep.subr.mxu0 0.0
    %67 = vmatpush1.msra.mxu0 0.0
    %68 = vmatprep.subr.mxu0 0.0
    %69 = vmatpush1.msra.mxu0 0.0
    %70 = vmatprep.subr.mxu0 0.0
    %71 = vmatpush1.msra.mxu0 0.0
    %72 = vmatprep.subr.mxu0 0.0
    %73 = vmatpush1.msra.mxu0 0.0
    %74 = vmatprep.subr.mxu0 0.0
    %75 = vmatpush1.msra.mxu0 0.0
    %76 = vmatprep.subr.mxu0 0.0
    %77 = vmatpush1.msra.mxu0 0.0
    %78 = vmatprep.subr.mxu0 0.0
    %79 = vmatpush1.msra.mxu0 0.0
    %80 = vmatprep.subr.mxu0 0.0
    %81 = vmatpush1.msra.mxu0 0.0
    %82 = vmatprep.subr.mxu0 0.0
    %83 = vmatpush1.msra.mxu0 0.0
    %84 = vmatprep.subr.mxu0 0.0
    %85 = vmatpush1.msra.mxu0 0.0
    %86 = vmatprep.subr.mxu0 0.0
    %87 = vmatpush1.msra.mxu0 0.0
    %88 = vmatprep.subr.mxu0 0.0
    %89 = vmatpush1.msra.mxu0 0.0
    %90 = vmatprep.subr.mxu0 0.0
    %91 = vmatpush1.msra.mxu0 0.0
    %92 = vmatprep.subr.mxu0 0.0
    %93 = vmatpush1.msra.mxu0 0.0
    %94 = vmatprep.subr.mxu0 0.0
    %95 = vmatpush1.msra.mxu0 0.0
    %96 = vmatprep.subr.mxu0 0.0
    %97 = vmatpush1.msra.mxu0 0.0
    %98 = vmatprep.subr.mxu0 0.0
    %99 = vmatpush1.msra.mxu0 0.0
    %100 = vmatprep.subr.mxu0 0.0
    %101 = vmatpush1.msra.mxu0 0.0
    %102 = vmatprep.subr.mxu0 0.0
    %103 = vmatpush1.msra.mxu0 0.0
    %104 = vmatprep.subr.mxu0 0.0
    %105 = vmatpush1.msra.mxu0 0.0
    %106 = vmatprep.subr.mxu0 0.0
    %107 = vmatpush1.msra.mxu0 0.0
    %108 = vmatprep.subr.mxu0 0.0
    %109 = vmatpush1.msra.mxu0 0.0
    %110 = vmatprep.subr.mxu0 0.0
    %111 = vmatpush1.msra.mxu0 0.0
    %112 = vmatprep.mubr.f32.mxu0 0.0
    %113 = vmatmul.mubr.f32.gmra.mrb[0].mxu0 %v46
    %v114 = vpop.f32.mrb[0].mxu0
    %v115 = vadd.f32 %v42, %v114
    %v116 = vpop.f32.mrb[0].mxu0
    %117 = vdwg.mxu0
    %v118 = vmax.f32 %v115, 0.0
    %v119 = vld [vmem:[#allocation2] sm:$0xff]
    %v120 = vld [vmem:[#allocation2 + $0x8] sm:$0xff]
    %v121 = vld [vmem:[#allocation2 + $0x10] sm:$0xff]
    %v122 = vld [vmem:[#allocation2 + $0x18] sm:$0xff]
    %v123 = vld [vmem:[#allocation2 + $0x20] sm:$0xff]
    %v124 = vld [vmem:[#allocation2 + $0x28] sm:$0xff]
    %v125 = vld [vmem:[#allocation2 + $0x30] sm:$0xff]
    %v126 = vld [vmem:[#allocation2 + $0x38] sm:$0xff]
    %v127 = vld [vmem:[#allocation2 + $0x40] sm:$0xff]
    %v128 = vld [vmem:[#allocation2 + $0x48] sm:$0xff]
    %v129 = vld [vmem:[#allocation2 + $0x50] sm:$0xff]
    %v130 = vld [vmem:[#allocation2 + $0x58] sm:$0xff]
    %v131 = vld [vmem:[#allocation2 + $0x60] sm:$0xff]
    %v132 = vld [vmem:[#allocation2 + $0x68] sm:$0xff]
    %v133 = vld [vmem:[#allocation2 + $0x70] sm:$0xff]
    %v134 = vld [vmem:[#allocation2 + $0x78] sm:$0xff]
    %v135 = vld [vmem:[%s4] sm:$0x1]
    %v137 = vlaneseq
    %v138 = vshrl.u32 %v137, 7
    %v139 = vsub.s32 0, %v138
    %v140 = vrot.slane %v135, %v139
    %142 = vmatprep.subr.mxu0 0.0
    %143 = vmatpush1.msra.mxu0 %v119
    %144 = vmatprep.subr.mxu0 0.0
    %145 = vmatpush1.msra.mxu0 %v120
    %146 = vmatprep.subr.mxu0 0.0
    %147 = vmatpush1.msra.mxu0 %v121
    %148 = vmatprep.subr.mxu0 0.0
    %149 = vmatpush1.msra.mxu0 %v122
    %150 = vmatprep.subr.mxu0 0.0
    %151 = vmatpush1.msra.mxu0 %v123
    %152 = vmatprep.subr.mxu0 0.0
    %153 = vmatpush1.msra.mxu0 %v124
    %154 = vmatprep.subr.mxu0 0.0
    %155 = vmatpush1.msra.mxu0 %v125
    %156 = vmatprep.subr.mxu0 0.0
    %157 = vmatpush1.msra.mxu0 %v126
    %158 = vmatprep.subr.mxu0 0.0
    %159 = vmatpush1.msra.mxu0 %v127
    %160 = vmatprep.subr.mxu0 0.0
    %161 = vmatpush1.msra.mxu0 %v128
    %162 = vmatprep.subr.mxu0 0.0
    %163 = vmatpush1.msra.mxu0 %v129
    %164 = vmatprep.subr.mxu0 0.0
    %165 = vmatpush1.msra.mxu0 %v130
    %166 = vmatprep.subr.mxu0 0.0
    %167 = vmatpush1.msra.mxu0 %v131
    %168 = vmatprep.subr.mxu0 0.0
    %169 = vmatpush1.msra.mxu0 %v132
    %170 = vmatprep.subr.mxu0 0.0
    %171 = vmatpush1.msra.mxu0 %v133
    %172 = vmatprep.subr.mxu0 0.0
    %173 = vmatpush1.msra.mxu0 %v134
    %174 = vmatprep.subr.mxu0 0.0
    %175 = vmatpush1.msra.mxu0 0.0
    %176 = vmatprep.subr.mxu0 0.0
    %177 = vmatpush1.msra.mxu0 0.0
    %178 = vmatprep.subr.mxu0 0.0
    %179 = vmatpush1.msra.mxu0 0.0
    %180 = vmatprep.subr.mxu0 0.0
    %181 = vmatpush1.msra.mxu0 0.0
    %182 = vmatprep.subr.mxu0 0.0
    %183 = vmatpush1.msra.mxu0 0.0
    %184 = vmatprep.subr.mxu0 0.0
    %185 = vmatpush1.msra.mxu0 0.0
    %186 = vmatprep.subr.mxu0 0.0
    %187 = vmatpush1.msra.mxu0 0.0
    %188 = vmatprep.subr.mxu0 0.0
    %189 = vmatpush1.msra.mxu0 0.0
    %190 = vmatprep.subr.mxu0 0.0
    %191 = vmatpush1.msra.mxu0 0.0
    %192 = vmatprep.subr.mxu0 0.0
    %193 = vmatpush1.msra.mxu0 0.0
    %194 = vmatprep.subr.mxu0 0.0
    %195 = vmatpush1.msra.mxu0 0.0
    %196 = vmatprep.subr.mxu0 0.0
    %197 = vmatpush1.msra.mxu0 0.0
    %198 = vmatprep.subr.mxu0 0.0
    %199 = vmatpush1.msra.mxu0 0.0
    %200 = vmatprep.subr.mxu0 0.0
    %201 = vmatpush1.msra.mxu0 0.0
    %202 = vmatprep.subr.mxu0 0.0
    %203 = vmatpush1.msra.mxu0 0.0
    %204 = vmatprep.subr.mxu0 0.0
    %205 = vmatpush1.msra.mxu0 0.0
    %206 = vmatprep.mubr.f32.mxu0 0.0
    %207 = vmatmul.mubr.f32.gmra.mrb[0].mxu0 %v118
    %v208 = vpop.f32.mrb[0].mxu0
    %v209 = vadd.f32 %v140, %v208
    %v210 = vpop.f32.mrb[0].mxu0
    %211 = vdwg.mxu0
    %212 = vmax.xlane.f32.xlu0 %v209
    %v213 = vpop.xlane.xlu0 %212
    %v214 = vsub.f32 %v209, %v213
    %v215 = vmul.f32 %v214, 1.442695
    %v216 = vpow.pop %v215
    %217 = vadd.xlane.f32.xlu0 %v216
    %v218 = vpop.xlane.xlu0 %217
    %v219 = vrcp.pop %v218
    %v220 = vmul.f32 %v218, %v219
    %v221 = vsub.f32 2.0, %v220
    %v222 = vmul.f32 %v219, %v221
    %v223 = vmul.f32 %v216, %v222
    %224 = vst [vmem:[%s5] sm:$0xff] %v223
    // Predicated region
    $region26: #{policy_forward.1} parent=1 // pred_check
      _
    $region27: #{policy_forward.1} parent=1 // pred_check_branch
      %226 = sbr.rel (0) target = $region29
    $region28: #{policy_forward.1} parent=1 // pred_region
      _
    $region29: #{policy_forward.1} parent=1 // pred_fallthru
      _
    // Predicated region
    $region30: #{policy_forward.1} parent=1 // pred_check
      _
    $region31: #{policy_forward.1} parent=1 // pred_check_branch
      %228 = sbr.rel (0) target = $region33
    $region32: #{policy_forward.1} parent=1 // pred_region
      _
    $region33: #{policy_forward.1} parent=1 // pred_fallthru
      _
    %229 = vsyncpa [#allocation3], 1

</llo_original>
